<compile_context>
chip_gen: v7x
topology: tpu7x:2x2x1
jax: 0.10.0
libtpu: 0.0.40
codegen_flags: <defaults>
</compile_context>

<pallas_src>
import functools

import jax
import jax.numpy as jnp
from jax.experimental import pallas as pl
from jax.experimental.pallas import tpu as pltpu

_LANE = 128
_SUBLANE = 8


def _round_up(x, m):
    return ((x + m - 1) // m) * m


def _pad2(a, rows, cols):
    r, c = a.shape
    if r == rows and c == cols:
        return a
    return jnp.pad(a, ((0, rows - r), (0, cols - c)))


def _cores_per_chip():
    """# of TensorCores a single 'parallel' Pallas grid axis can shard across."""
    try:
        kind = jax.devices()[0].device_kind.lower()
    except Exception:
        return 1
    if "v7" in kind or "v5p" in kind or ("v4" in kind and "lite" not in kind):
        return 2
    return 1


def _vmem_budget_bytes():
    """~75% of physical VMEM: ~96 MiB on v5e/v6e (128 MiB), ~48 MiB on v7x (64 MiB)."""
    try:
        phys = int(pltpu.get_tpu_info().vmem_capacity_bytes)
    except Exception:
        phys = 64 * 1024 * 1024  # conservative fallback
    return (phys * 3) // 4


def _pick_block_b(B, F, H, O, x_itemsize, w_itemsize, vmem_budget, n_cores):
    """Largest multiple-of-8 batch tile that fits the VMEM budget.  On 2-TC chips
    (v7x / megacore) prefer >=2 grid steps so the parallel axis shards across cores;
    on single-TC chips (v5e/v6e) a single big tile (grid=(1,)) is best."""
    b_pad = _round_up(B, _SUBLANE)
    # weights/biases are single-buffered (pl.Buffered(1)); biases are f32
    weight_bytes = w_itemsize * (F * H + H * O) + 4 * (H + O)
    blk = b_pad
    while blk > _SUBLANE:
        io_bytes = 2 * blk * x_itemsize * (F + O)   # x + out blocks, double-buffered
        live_bytes = 4 * blk * (H + O)              # f32 hidden + f32 epilogue values
        if weight_bytes + io_bytes + live_bytes <= vmem_budget:
            break
        blk = _round_up(blk // 2, _SUBLANE)
    blk = max(_SUBLANE, blk)
    if n_cores >= 2 and b_pad <= blk and b_pad > _SUBLANE:
        # whole batch fits in one tile -> split in two so both TensorCores get work
        blk = max(_SUBLANE, _round_up(b_pad // 2, _SUBLANE))
    return blk


def mlp_kernel(x_ref, w1_ref, b1_ref, w2_ref, b2_ref, o_ref):
    # hidden = relu(x @ W1 + b1) -- MXU matmul, f32 accumulation, f32 epilogue
    h = jnp.dot(x_ref[...], w1_ref[...], preferred_element_type=jnp.float32)
    h = jnp.maximum(h + b1_ref[...], 0.0)
    # out = sigmoid(h @ W2 + b2); cast h to the weight dtype so bf16 weights hit the
    # bf16 MXU path (no-op cast on the f32 path), accumulate in f32.
    y = jnp.dot(h.astype(w2_ref.dtype), w2_ref[...],
                preferred_element_type=jnp.float32)
    y = y + b2_ref[...]
    # sigmoid(y) = 0.5*tanh(0.5*y) + 0.5 : single EUP transcendental, exact semantics.
    o_ref[...] = (0.5 * jnp.tanh(0.5 * y) + 0.5).astype(o_ref.dtype)


def pad_params(w1, b1, w2, b2):
    """Zero-pad hidden/output dims to lane multiples.  Call ONCE (hoisted out of the
    per-forward path).  Weights are stored [in_features, out_features] (transposed vs
    PyTorch) so the kernel is a plain x @ W on the MXU."""
    n_feature, n_hidden = w1.shape
    n_output = w2.shape[1]
    H = _round_up(n_hidden, _LANE)
    O = _round_up(n_output, _LANE)   # lane-dense output block -> unmasked stores
    w1p = _pad2(jnp.asarray(w1), n_feature, H)
    w2p = _pad2(jnp.asarray(w2), H, O)
    # biases stay f32 (f32 epilogue on every generation; v5e VPU/EUP have no bf16)
    b1p = _pad2(jnp.asarray(b1, jnp.float32).reshape(1, n_hidden), 1, H)
    b2p = _pad2(jnp.asarray(b2, jnp.float32).reshape(1, n_output), 1, O)
    return w1p, b1p, w2p, b2p, n_output


@functools.partial(jax.jit,
                   static_argnames=("n_output", "block_b", "vmem_limit_bytes"))
def mlp_forward_padded(x, w1p, b1p, w2p, b2p, *, n_output,
                       block_b=None, vmem_limit_bytes=None):
    B, n_feature = x.shape
    F = n_feature            # true feature dim; block last dim == full dim (no x padding)
    H = w1p.shape[1]
    O = w2p.shape[1]
    assert w1p.shape[0] == F and w2p.shape[0] == H and b1p.shape == (1, H) \
        and b2p.shape == (1, O)

    n_cores = _cores_per_chip()
    if vmem_limit_bytes is None:
        vmem_limit_bytes = _vmem_budget_bytes()
    if block_b is None:
        block_b = _pick_block_b(B, F, H, O,
                                x.dtype.itemsize, w1p.dtype.itemsize,
                                vmem_limit_bytes, n_cores)

    # pad batch (only) to a multiple of the tile
    Bp = _round_up(B, block_b)
    xp = x if Bp == B else jnp.pad(x, ((0, Bp - B), (0, 0)))
    grid = (Bp // block_b,)

    # TODO(synk): for realistic dims (e.g. F=H=O>=2048) add a hidden-dim grid axis
    # ("arbitrary", 256-granularity tiles on v6e/v7x, 128 on v5e) with an f32 VMEM
    # accumulator so weight residency stays bounded inside v7x's 64 MiB VMEM.
    resident = functools.partial(pl.BlockSpec, pipeline_mode=pl.Buffered(1))

    out = pl.pallas_call(
        mlp_kernel,
        out_shape=jax.ShapeDtypeStruct((Bp, O), x.dtype),
        grid_spec=pltpu.PrefetchScalarGridSpec(
            num_scalar_prefetch=0,
            grid=grid,
            in_specs=[
                # batch tile of the input (feature dim = full array dim, unpadded)
                pl.BlockSpec((block_b, F), lambda i: (i, 0)),
                # weights / biases: full arrays, same block every step, single-buffered
                resident((F, H), lambda i: (0, 0)),
                resident((1, H), lambda i: (0, 0)),
                resident((H, O), lambda i: (0, 0)),
                resident((1, O), lambda i: (0, 0)),
            ],
            out_specs=pl.BlockSpec((block_b, O), lambda i: (i, 0)),
        ),
        compiler_params=pltpu.CompilerParams(
            dimension_semantics=("parallel",),
            vmem_limit_bytes=vmem_limit_bytes,
        ),
    )(xp, w1p, b1p, w2p, b2p)

    # slice off batch / output-lane padding
    return out[:B, :n_output]


def mlp_forward(x, w1, b1, w2, b2, **kwargs):
    """Convenience one-shot wrapper (pads params every call; prefer pad_params +
    mlp_forward_padded in a hot loop)."""
    w1p, b1p, w2p, b2p, n_output = pad_params(w1, b1, w2, b2)
    return mlp_forward_padded(x, w1p, b1p, w2p, b2p, n_output=n_output, **kwargs)


def mlp_reference(x, w1, b1, w2, b2):
    h = jnp.maximum(x.astype(jnp.float32) @ w1.astype(jnp.float32) + b1, 0.0)
    return jax.nn.sigmoid(h @ w2.astype(jnp.float32) + b2)


if __name__ == "__main__":
    # Shapes consistent with the module's forward: n_feature=32, n_hidden=64,
    # n_output=16, batch 256.
    B, n_feature, n_hidden, n_output = 256, 32, 64, 16

    key = jax.random.PRNGKey(0)
    kx, kw1, kb1, kw2, kb2 = jax.random.split(key, 5)

    x = jax.random.normal(kx, (B, n_feature), dtype=jnp.float32)

    # nn.Linear-style uniform(-1/sqrt(fan_in), +1/sqrt(fan_in)) init
    lim1 = 1.0 / jnp.sqrt(jnp.float32(n_feature))
    w1 = jax.random.uniform(kw1, (n_feature, n_hidden), jnp.float32, -lim1, lim1)
    b1 = jax.random.uniform(kb1, (n_hidden,), jnp.float32, -lim1, lim1)
    lim2 = 1.0 / jnp.sqrt(jnp.float32(n_hidden))
    w2 = jax.random.uniform(kw2, (n_hidden, n_output), jnp.float32, -lim2, lim2)
    b2 = jax.random.uniform(kb2, (n_output,), jnp.float32, -lim2, lim2)

    ref = mlp_reference(x, w1, b1, w2, b2)

    # f32 path: pad params once (hoisted), then run the jitted forward
    w1p, b1p, w2p, b2p, n_out = pad_params(w1, b1, w2, b2)
    out = jax.block_until_ready(
        mlp_forward_padded(x, w1p, b1p, w2p, b2p, n_output=n_out))
    assert out.shape == (B, n_output)
    assert jnp.allclose(out, ref, atol=2e-3, rtol=2e-3), "f32 mismatch vs reference"

    # bf16 operand path (valid throughput mode on v5e/v6e/v7x): bf16 x/W1/W2,
    # f32 accumulation and f32 bias/ReLU/sigmoid epilogue.
    w1pb, b1pb, w2pb, b2pb, n_out_b = pad_params(
        w1.astype(jnp.bfloat16), b1, w2.astype(jnp.bfloat16), b2)
    out_bf16 = jax.block_until_ready(
        mlp_forward_padded(x.astype(jnp.bfloat16), w1pb, b1pb, w2pb, b2pb,
                           n_output=n_out_b))
    assert jnp.allclose(out_bf16.astype(jnp.float32), ref, atol=3e-2, rtol=3e-2), \
        "bf16 mismatch vs reference"

    print("KERNEL_OK")
</pallas_src>

<mosaic_0001>
module attributes {stable_mosaic.version = 11 : i64} {
  func.func @mlp_kernel(%arg0: i32, %arg1: memref<256x32xf32, #tpu.memory_space<vmem>>, %arg2: memref<32x128xf32, #tpu.memory_space<vmem>>, %arg3: memref<1x128xf32, #tpu.memory_space<vmem>>, %arg4: memref<128x128xf32, #tpu.memory_space<vmem>>, %arg5: memref<1x128xf32, #tpu.memory_space<vmem>>, %arg6: memref<256x128xf32, #tpu.memory_space<vmem>>) attributes {dimension_semantics = [#tpu.dimension_semantics<parallel>], iteration_bounds = array<i64: 1>, scalar_prefetch = 0 : i64, scratch_operands = 0 : i64, tpu.core_type = #tpu.core_type<tc>, window_params = [{transform_indices = @transform_0, window_bounds = array<i64: 256, 32>}, {pipeline_mode = #tpu.pipeline_mode<synchronous>, transform_indices = @transform_1, window_bounds = array<i64: 32, 128>}, {pipeline_mode = #tpu.pipeline_mode<synchronous>, transform_indices = @transform_2, window_bounds = array<i64: 1, 128>}, {pipeline_mode = #tpu.pipeline_mode<synchronous>, transform_indices = @transform_3, window_bounds = array<i64: 128, 128>}, {pipeline_mode = #tpu.pipeline_mode<synchronous>, transform_indices = @transform_4, window_bounds = array<i64: 1, 128>}, {transform_indices = @transform_5, window_bounds = array<i64: 256, 128>}]} {
    %c0 = arith.constant 0 : index
    %c0_0 = arith.constant 0 : index
    %0 = vector.load %arg1[%c0, %c0_0] : memref<256x32xf32, #tpu.memory_space<vmem>>, vector<256x32xf32>
    %c0_1 = arith.constant 0 : index
    %c0_2 = arith.constant 0 : index
    %1 = vector.load %arg2[%c0_1, %c0_2] : memref<32x128xf32, #tpu.memory_space<vmem>>, vector<32x128xf32>
    %cst = arith.constant dense<0.000000e+00> : vector<256x128xf32>
    %2 = tpu.matmul %0, %1, %cst {dimension_numbers = #tpu.dot_dimension_numbers<[1], [0], [0], [1], [0, 0, 1, 1], [], []>} : vector<256x32xf32>, vector<32x128xf32>, vector<256x128xf32> -> vector<256x128xf32>
    %c0_3 = arith.constant 0 : index
    %c0_4 = arith.constant 0 : index
    %3 = vector.load %arg3[%c0_3, %c0_4] : memref<1x128xf32, #tpu.memory_space<vmem>>, vector<1x128xf32>
    %4 = vector.broadcast %3 : vector<1x128xf32> to vector<256x128xf32>
    %5 = arith.addf %2, %4 : vector<256x128xf32>
    %cst_5 = arith.constant 0.000000e+00 : f32
    %6 = vector.broadcast %cst_5 : f32 to vector<256x128xf32>
    %7 = arith.maximumf %5, %6 : vector<256x128xf32>
    %c0_6 = arith.constant 0 : index
    %c0_7 = arith.constant 0 : index
    %8 = vector.load %arg4[%c0_6, %c0_7] : memref<128x128xf32, #tpu.memory_space<vmem>>, vector<128x128xf32>
    %cst_8 = arith.constant dense<0.000000e+00> : vector<256x128xf32>
    %9 = tpu.matmul %7, %8, %cst_8 {dimension_numbers = #tpu.dot_dimension_numbers<[1], [0], [0], [1], [0, 0, 1, 1], [], []>} : vector<256x128xf32>, vector<128x128xf32>, vector<256x128xf32> -> vector<256x128xf32>
    %c0_9 = arith.constant 0 : index
    %c0_10 = arith.constant 0 : index
    %10 = vector.load %arg5[%c0_9, %c0_10] : memref<1x128xf32, #tpu.memory_space<vmem>>, vector<1x128xf32>
    %11 = vector.broadcast %10 : vector<1x128xf32> to vector<256x128xf32>
    %12 = arith.addf %9, %11 : vector<256x128xf32>
    %cst_11 = arith.constant 5.000000e-01 : f32
    %13 = vector.broadcast %cst_11 : f32 to vector<256x128xf32>
    %14 = arith.mulf %13, %12 : vector<256x128xf32>
    %15 = math.tanh %14 : vector<256x128xf32>
    %cst_12 = arith.constant 5.000000e-01 : f32
    %16 = vector.broadcast %cst_12 : f32 to vector<256x128xf32>
    %17 = arith.mulf %16, %15 : vector<256x128xf32>
    %cst_13 = arith.constant 5.000000e-01 : f32
    %18 = vector.broadcast %cst_13 : f32 to vector<256x128xf32>
    %19 = arith.addf %17, %18 : vector<256x128xf32>
    %c0_14 = arith.constant 0 : index
    %c0_15 = arith.constant 0 : index
    %20 = vector.load %arg6[%c0_14, %c0_15] : memref<256x128xf32, #tpu.memory_space<vmem>>, vector<256x128xf32>
    tpu.vector_store %arg6[%c0_14, %c0_15], %19 {strides = array<i32>} : memref<256x128xf32, #tpu.memory_space<vmem>>, vector<256x128xf32>,
    return
  }
  func.func @transform_0(%arg0: i32) -> (i32, i32) {
    %c0_i32 = arith.constant 0 : i32
    %c0_i32_0 = arith.constant 0 : i32
    return %arg0, %c0_i32 : i32, i32
  }
  func.func @transform_1(%arg0: i32) -> (i32, i32) {
    %c0_i32 = arith.constant 0 : i32
    %c0_i32_0 = arith.constant 0 : i32
    %c0_i32_1 = arith.constant 0 : i32
    return %c0_i32, %c0_i32_0 : i32, i32
  }
  func.func @transform_2(%arg0: i32) -> (i32, i32) {
    %c0_i32 = arith.constant 0 : i32
    %c0_i32_0 = arith.constant 0 : i32
    %c0_i32_1 = arith.constant 0 : i32
    return %c0_i32, %c0_i32_0 : i32, i32
  }
  func.func @transform_3(%arg0: i32) -> (i32, i32) {
    %c0_i32 = arith.constant 0 : i32
    %c0_i32_0 = arith.constant 0 : i32
    %c0_i32_1 = arith.constant 0 : i32
    return %c0_i32, %c0_i32_0 : i32, i32
  }
  func.func @transform_4(%arg0: i32) -> (i32, i32) {
    %c0_i32 = arith.constant 0 : i32
    %c0_i32_0 = arith.constant 0 : i32
    %c0_i32_1 = arith.constant 0 : i32
    return %c0_i32, %c0_i32_0 : i32, i32
  }
  func.func @transform_5(%arg0: i32) -> (i32, i32) {
    %c0_i32 = arith.constant 0 : i32
    %c0_i32_0 = arith.constant 0 : i32
    return %arg0, %c0_i32 : i32, i32
  }
}

</mosaic_0001>

<llo_original>
// kernel: mlp_forward_padded.1
$region0: #{mlp_forward_padded.1}
  #allocation0 [shape = 'u32[]', space=smem, size = 0x4, offset = 0x4, fixed_abs, tag = 'smem constant byte address 0x4 - core index']
  #allocation1 [shape = 'u32[144,128]{1,0:T(1,128)}', space=vmem, size = 0x12000, scoped, tag = 'internal scratch']
  %s0 = inlined_call_operand.vmem [shape: f32[256,32], index: 0, kind: input, shape index: {}]
  %s1 = inlined_call_operand.vmem [shape: f32[32,128], index: 1, kind: input, shape index: {}]
  %s2 = inlined_call_operand.vmem [shape: f32[1,128], index: 2, kind: input, shape index: {}]
  %s3 = inlined_call_operand.vmem [shape: f32[128,128], index: 3, kind: input, shape index: {}]
  %s4 = inlined_call_operand.vmem [shape: f32[1,128], index: 4, kind: input, shape index: {}]
  %s5 = inlined_call_operand.vmem [shape: f32[256,128], index: 5, kind: output, shape index: {}]
  %s6 = sld [smem:[#allocation0]]
  $region30: #{mlp_forward_padded.1} parent=0
    _
  %s8 = ssub.s32 1, %s6
  %s9 = scalar_select 0, %s8, %s6
  // Predicated region
  $region2: #{mlp_forward_padded.1} parent=0 // pred_check
    _
  $region3: #{mlp_forward_padded.1} parent=0 // pred_check_branch
    %11 = sbr.rel (0) target = $region5
  $region4: #{mlp_forward_padded.1} parent=0 // pred_region
    _
  $region5: #{mlp_forward_padded.1} parent=0 // pred_fallthru
    _
  // Predicated region
  $region6: #{mlp_forward_padded.1} parent=0 // pred_check
    _
  $region7: #{mlp_forward_padded.1} parent=0 // pred_check_branch
    %13 = sbr.rel (0) target = $region9
  $region8: #{mlp_forward_padded.1} parent=0 // pred_region
    _
  $region9: #{mlp_forward_padded.1} parent=0 // pred_fallthru
    _
  // Predicated region
  $region10: #{mlp_forward_padded.1} parent=0 // pred_check
    _
  $region11: #{mlp_forward_padded.1} parent=0 // pred_check_branch
    %15 = sbr.rel (0) target = $region13
  $region12: #{mlp_forward_padded.1} parent=0 // pred_region
    _
  $region13: #{mlp_forward_padded.1} parent=0 // pred_fallthru
    _
  // Predicated region
  $region14: #{mlp_forward_padded.1} parent=0 // pred_check
    _
  $region15: #{mlp_forward_padded.1} parent=0 // pred_check_branch
    %17 = sbr.rel (0) target = $region17
  $region16: #{mlp_forward_padded.1} parent=0 // pred_region
    _
  $region17: #{mlp_forward_padded.1} parent=0 // pred_fallthru
    _
  // Predicated region
  $region18: #{mlp_forward_padded.1} parent=0 // pred_check
    _
  $region19: #{mlp_forward_padded.1} parent=0 // pred_check_branch
    %19 = sbr.rel (0) target = $region21
  $region20: #{mlp_forward_padded.1} parent=0 // pred_region
    _
  $region21: #{mlp_forward_padded.1} parent=0 // pred_fallthru
    _
  %v20 = vld [vmem:[%s0] sm:$0xff]
  %v21 = vld [vmem:[%s0 + $0x8] sm:$0xff]
  %v22 = vld [vmem:[%s0 + $0x10] sm:$0xff]
  %v23 = vld [vmem:[%s0 + $0x18] sm:$0xff]
  %v24 = vld [vmem:[%s0 + $0x20] sm:$0xff]
  %v25 = vld [vmem:[%s0 + $0x28] sm:$0xff]
  %v26 = vld [vmem:[%s0 + $0x30] sm:$0xff]
  %v27 = vld [vmem:[%s0 + $0x38] sm:$0xff]
  %v28 = vld [vmem:[%s0 + $0x40] sm:$0xff]
  %v29 = vld [vmem:[%s0 + $0x48] sm:$0xff]
  %v30 = vld [vmem:[%s0 + $0x50] sm:$0xff]
  %v31 = vld [vmem:[%s0 + $0x58] sm:$0xff]
  %v32 = vld [vmem:[%s0 + $0x60] sm:$0xff]
  %v33 = vld [vmem:[%s0 + $0x68] sm:$0xff]
  %v34 = vld [vmem:[%s0 + $0x70] sm:$0xff]
  %v35 = vld [vmem:[%s0 + $0x78] sm:$0xff]
  %v36 = vld [vmem:[%s0 + $0x80] sm:$0xff]
  %v37 = vld [vmem:[%s0 + $0x88] sm:$0xff]
  %v38 = vld [vmem:[%s0 + $0x90] sm:$0xff]
  %v39 = vld [vmem:[%s0 + $0x98] sm:$0xff]
  %v40 = vld [vmem:[%s0 + $0xa0] sm:$0xff]
  %v41 = vld [vmem:[%s0 + $0xa8] sm:$0xff]
  %v42 = vld [vmem:[%s0 + $0xb0] sm:$0xff]
  %v43 = vld [vmem:[%s0 + $0xb8] sm:$0xff]
  %v44 = vld [vmem:[%s0 + $0xc0] sm:$0xff]
  %v45 = vld [vmem:[%s0 + $0xc8] sm:$0xff]
  %v46 = vld [vmem:[%s0 + $0xd0] sm:$0xff]
  %v47 = vld [vmem:[%s0 + $0xd8] sm:$0xff]
  %v48 = vld [vmem:[%s0 + $0xe0] sm:$0xff]
  %v49 = vld [vmem:[%s0 + $0xe8] sm:$0xff]
  %v50 = vld [vmem:[%s0 + $0xf0] sm:$0xff]
  %v51 = vld [vmem:[%s0 + $0xf8] sm:$0xff]
  %v52 = vld [vmem:[%s1] sm:$0xff]
  %v53 = vld [vmem:[%s1 + $0x8] sm:$0xff]
  %v54 = vld [vmem:[%s1 + $0x10] sm:$0xff]
  %v55 = vld [vmem:[%s1 + $0x18] sm:$0xff]
  %v56 = vld [vmem:[%s2] sm:$0x1]
  %v58 = vlaneseq
  %v59 = vshrl.u32 %v58, 7
  %v60 = vsub.s32 0, %v59
  %v61 = vrot.slane %v56, %v60
  %vm63 = vcmask 261120
  %v65 = vsel %vm63, %v20, 0
  %v68 = vsel %vm63, %v21, 0
  %v71 = vsel %vm63, %v22, 0
  %v74 = vsel %vm63, %v23, 0
  %v77 = vsel %vm63, %v24, 0
  %v80 = vsel %vm63, %v25, 0
  %v83 = vsel %vm63, %v26, 0
  %v86 = vsel %vm63, %v27, 0
  %v89 = vsel %vm63, %v28, 0
  %v92 = vsel %vm63, %v29, 0
  %v95 = vsel %vm63, %v30, 0
  %v98 = vsel %vm63, %v31, 0
  %v101 = vsel %vm63, %v32, 0
  %v104 = vsel %vm63, %v33, 0
  %v107 = vsel %vm63, %v34, 0
  %v110 = vsel %vm63, %v35, 0
  %v113 = vsel %vm63, %v36, 0
  %v116 = vsel %vm63, %v37, 0
  %v119 = vsel %vm63, %v38, 0
  %v122 = vsel %vm63, %v39, 0
  %v125 = vsel %vm63, %v40, 0
  %v128 = vsel %vm63, %v41, 0
  %v131 = vsel %vm63, %v42, 0
  %v134 = vsel %vm63, %v43, 0
  %v137 = vsel %vm63, %v44, 0
  %v140 = vsel %vm63, %v45, 0
  %v143 = vsel %vm63, %v46, 0
  %v146 = vsel %vm63, %v47, 0
  %v149 = vsel %vm63, %v48, 0
  %v152 = vsel %vm63, %v49, 0
  %v155 = vsel %vm63, %v50, 0
  %v158 = vsel %vm63, %v51, 0
  %160 = vmatprep.subr.mxu0 0.0
  %161 = vmatpush1.msra.mxu0 %v52
  %162 = vmatprep.subr.mxu0 0.0
  %163 = vmatpush1.msra.mxu0 %v53
  %164 = vmatprep.subr.mxu0 0.0
  %165 = vmatpush1.msra.mxu0 %v54
  %166 = vmatprep.subr.mxu0 0.0
  %167 = vmatpush1.msra.mxu0 %v55
  %168 = vmatprep.subr.mxu0 0.0
  %169 = vmatpush1.msra.mxu0 0.0
  %170 = vmatprep.subr.mxu0 0.0
  %171 = vmatpush1.msra.mxu0 0.0
  %172 = vmatprep.subr.mxu0 0.0
  %173 = vmatpush1.msra.mxu0 0.0
  %174 = vmatprep.subr.mxu0 0.0
  %175 = vmatpush1.msra.mxu0 0.0
  %176 = vmatprep.subr.mxu0 0.0
  %177 = vmatpush1.msra.mxu0 0.0
  %178 = vmatprep.subr.mxu0 0.0
  %179 = vmatpush1.msra.mxu0 0.0
  %180 = vmatprep.subr.mxu0 0.0
  %181 = vmatpush1.msra.mxu0 0.0
  %182 = vmatprep.subr.mxu0 0.0
  %183 = vmatpush1.msra.mxu0 0.0
  %184 = vmatprep.subr.mxu0 0.0
  %185 = vmatpush1.msra.mxu0 0.0
  %186 = vmatprep.subr.mxu0 0.0
  %187 = vmatpush1.msra.mxu0 0.0
  %188 = vmatprep.subr.mxu0 0.0
  %189 = vmatpush1.msra.mxu0 0.0
  %190 = vmatprep.subr.mxu0 0.0
  %191 = vmatpush1.msra.mxu0 0.0
  %192 = vmatprep.subr.mxu0 0.0
  %193 = vmatpush1.msra.mxu0 0.0
  %194 = vmatprep.subr.mxu0 0.0
  %195 = vmatpush1.msra.mxu0 0.0
  %196 = vmatprep.subr.mxu0 0.0
  %197 = vmatpush1.msra.mxu0 0.0
  %198 = vmatprep.subr.mxu0 0.0
  %199 = vmatpush1.msra.mxu0 0.0
  %200 = vmatprep.subr.mxu0 0.0
  %201 = vmatpush1.msra.mxu0 0.0
  %202 = vmatprep.subr.mxu0 0.0
  %203 = vmatpush1.msra.mxu0 0.0
  %204 = vmatprep.subr.mxu0 0.0
  %205 = vmatpush1.msra.mxu0 0.0
  %206 = vmatprep.subr.mxu0 0.0
  %207 = vmatpush1.msra.mxu0 0.0
  %208 = vmatprep.subr.mxu0 0.0
  %209 = vmatpush1.msra.mxu0 0.0
  %210 = vmatprep.subr.mxu0 0.0
  %211 = vmatpush1.msra.mxu0 0.0
  %212 = vmatprep.subr.mxu0 0.0
  %213 = vmatpush1.msra.mxu0 0.0
  %214 = vmatprep.subr.mxu0 0.0
  %215 = vmatpush1.msra.mxu0 0.0
  %216 = vmatprep.subr.mxu0 0.0
  %217 = vmatpush1.msra.mxu0 0.0
  %218 = vmatprep.subr.mxu0 0.0
  %219 = vmatpush1.msra.mxu0 0.0
  %220 = vmatprep.subr.mxu0 0.0
  %221 = vmatpush1.msra.mxu0 0.0
  %222 = vmatprep.subr.mxu0 0.0
  %223 = vmatpush1.msra.mxu0 0.0
  %224 = vmatprep.mubr.f32.mxu0 0.0
  %225 = vmatmul.mubr.f32.gmra.mrb[0].mxu0 %v65
  %v226 = vpop.f32.mrb[0].mxu0
  %v227 = vadd.f32 %v61, %v226
  %v228 = vpop.f32.mrb[0].mxu0
  %229 = vmatprep.mubr.f32.mxu0 0.0
  %230 = vmatmul.mubr.f32.gmra.mrb[0].mxu0 %v68
  %v231 = vpop.f32.mrb[0].mxu0
  %v232 = vadd.f32 %v61, %v231
  %v233 = vpop.f32.mrb[0].mxu0
  %234 = vmatprep.mubr.f32.mxu0 0.0
  %235 = vmatmul.mubr.f32.gmra.mrb[0].mxu0 %v71
  %v236 = vpop.f32.mrb[0].mxu0
  %v237 = vadd.f32 %v61, %v236
  %v238 = vpop.f32.mrb[0].mxu0
  %239 = vmatprep.mubr.f32.mxu0 0.0
  %240 = vmatmul.mubr.f32.gmra.mrb[0].mxu0 %v74
  %v241 = vpop.f32.mrb[0].mxu0
  %v242 = vadd.f32 %v61, %v241
  %v243 = vpop.f32.mrb[0].mxu0
  %244 = vmatprep.mubr.f32.mxu0 0.0
  %245 = vmatmul.mubr.f32.gmra.mrb[0].mxu0 %v77
  %v246 = vpop.f32.mrb[0].mxu0
  %v247 = vadd.f32 %v61, %v246
  %v248 = vpop.f32.mrb[0].mxu0
  %249 = vmatprep.mubr.f32.mxu0 0.0
  %250 = vmatmul.mubr.f32.gmra.mrb[0].mxu0 %v80
  %v251 = vpop.f32.mrb[0].mxu0
  %v252 = vadd.f32 %v61, %v251
  %v253 = vpop.f32.mrb[0].mxu0
  %254 = vmatprep.mubr.f32.mxu0 0.0
  %255 = vmatmul.mubr.f32.gmra.mrb[0].mxu0 %v83
  %v256 = vpop.f32.mrb[0].mxu0
  %v257 = vadd.f32 %v61, %v256
  %v258 = vpop.f32.mrb[0].mxu0
  %259 = vmatprep.mubr.f32.mxu0 0.0
  %260 = vmatmul.mubr.f32.gmra.mrb[0].mxu0 %v86
  %v261 = vpop.f32.mrb[0].mxu0
  %v262 = vadd.f32 %v61, %v261
  %v263 = vpop.f32.mrb[0].mxu0
  %264 = vmatprep.mubr.f32.mxu0 0.0
  %265 = vmatmul.mubr.f32.gmra.mrb[0].mxu0 %v89
  %v266 = vpop.f32.mrb[0].mxu0
  %v267 = vadd.f32 %v61, %v266
  %v268 = vpop.f32.mrb[0].mxu0
  %269 = vmatprep.mubr.f32.mxu0 0.0
  %270 = vmatmul.mubr.f32.gmra.mrb[0].mxu0 %v92
  %v271 = vpop.f32.mrb[0].mxu0
  %v272 = vadd.f32 %v61, %v271
  %v273 = vpop.f32.mrb[0].mxu0
  %274 = vmatprep.mubr.f32.mxu0 0.0
  %275 = vmatmul.mubr.f32.gmra.mrb[0].mxu0 %v95
  %v276 = vpop.f32.mrb[0].mxu0
  %v277 = vadd.f32 %v61, %v276
  %v278 = vpop.f32.mrb[0].mxu0
  %279 = vmatprep.mubr.f32.mxu0 0.0
  %280 = vmatmul.mubr.f32.gmra.mrb[0].mxu0 %v98
  %v281 = vpop.f32.mrb[0].mxu0
  %v282 = vadd.f32 %v61, %v281
  %v283 = vpop.f32.mrb[0].mxu0
  %284 = vmatprep.mubr.f32.mxu0 0.0
  %285 = vmatmul.mubr.f32.gmra.mrb[0].mxu0 %v101
  %v286 = vpop.f32.mrb[0].mxu0
  %v287 = vadd.f32 %v61, %v286
  %v288 = vpop.f32.mrb[0].mxu0
  %289 = vmatprep.mubr.f32.mxu0 0.0
  %290 = vmatmul.mubr.f32.gmra.mrb[0].mxu0 %v104
  %v291 = vpop.f32.mrb[0].mxu0
  %v292 = vadd.f32 %v61, %v291
  %v293 = vpop.f32.mrb[0].mxu0
  %294 = vmatprep.mubr.f32.mxu0 0.0
  %295 = vmatmul.mubr.f32.gmra.mrb[0].mxu0 %v107
  %v296 = vpop.f32.mrb[0].mxu0
  %v297 = vadd.f32 %v61, %v296
  %v298 = vpop.f32.mrb[0].mxu0
  %299 = vmatprep.mubr.f32.mxu0 0.0
  %300 = vmatmul.mubr.f32.gmra.mrb[0].mxu0 %v110
  %v301 = vpop.f32.mrb[0].mxu0
  %v302 = vadd.f32 %v61, %v301
  %v303 = vpop.f32.mrb[0].mxu0
  %304 = vmatprep.mubr.f32.mxu0 0.0
  %305 = vmatmul.mubr.f32.gmra.mrb[0].mxu0 %v113
  %v306 = vpop.f32.mrb[0].mxu0
  %v307 = vadd.f32 %v61, %v306
  %v308 = vpop.f32.mrb[0].mxu0
  %309 = vmatprep.mubr.f32.mxu0 0.0
  %310 = vmatmul.mubr.f32.gmra.mrb[0].mxu0 %v116
  %v311 = vpop.f32.mrb[0].mxu0
  %v312 = vadd.f32 %v61, %v311
  %v313 = vpop.f32.mrb[0].mxu0
  %314 = vmatprep.mubr.f32.mxu0 0.0
  %315 = vmatmul.mubr.f32.gmra.mrb[0].mxu0 %v119
  %v316 = vpop.f32.mrb[0].mxu0
  %v317 = vadd.f32 %v61, %v316
  %v318 = vpop.f32.mrb[0].mxu0
  %319 = vmatprep.mubr.f32.mxu0 0.0
  %320 = vmatmul.mubr.f32.gmra.mrb[0].mxu0 %v122
  %v321 = vpop.f32.mrb[0].mxu0
  %v322 = vadd.f32 %v61, %v321
  %v323 = vpop.f32.mrb[0].mxu0
  %324 = vmatprep.mubr.f32.mxu0 0.0
  %325 = vmatmul.mubr.f32.gmra.mrb[0].mxu0 %v125
  %v326 = vpop.f32.mrb[0].mxu0
  %v327 = vadd.f32 %v61, %v326
  %v328 = vpop.f32.mrb[0].mxu0
  %329 = vmatprep.mubr.f32.mxu0 0.0
  %330 = vmatmul.mubr.f32.gmra.mrb[0].mxu0 %v128
  %v331 = vpop.f32.mrb[0].mxu0
  %v332 = vadd.f32 %v61, %v331
  %v333 = vpop.f32.mrb[0].mxu0
  %334 = vmatprep.mubr.f32.mxu0 0.0
  %335 = vmatmul.mubr.f32.gmra.mrb[0].mxu0 %v131
  %v336 = vpop.f32.mrb[0].mxu0
  %v337 = vadd.f32 %v61, %v336
  %v338 = vpop.f32.mrb[0].mxu0
  %339 = vmatprep.mubr.f32.mxu0 0.0
  %340 = vmatmul.mubr.f32.gmra.mrb[0].mxu0 %v134
  %v341 = vpop.f32.mrb[0].mxu0
  %v342 = vadd.f32 %v61, %v341
  %v343 = vpop.f32.mrb[0].mxu0
  %344 = vmatprep.mubr.f32.mxu0 0.0
  %345 = vmatmul.mubr.f32.gmra.mrb[0].mxu0 %v137
  %v346 = vpop.f32.mrb[0].mxu0
  %v347 = vadd.f32 %v61, %v346
  %v348 = vpop.f32.mrb[0].mxu0
  %349 = vmatprep.mubr.f32.mxu0 0.0
  %350 = vmatmul.mubr.f32.gmra.mrb[0].mxu0 %v140
  %v351 = vpop.f32.mrb[0].mxu0
  %v352 = vadd.f32 %v61, %v351
  %v353 = vpop.f32.mrb[0].mxu0
  %354 = vmatprep.mubr.f32.mxu0 0.0
  %355 = vmatmul.mubr.f32.gmra.mrb[0].mxu0 %v143
  %v356 = vpop.f32.mrb[0].mxu0
  %v357 = vadd.f32 %v61, %v356
  %v358 = vpop.f32.mrb[0].mxu0
  %359 = vmatprep.mubr.f32.mxu0 0.0
  %360 = vmatmul.mubr.f32.gmra.mrb[0].mxu0 %v146
  %v361 = vpop.f32.mrb[0].mxu0
  %v362 = vadd.f32 %v61, %v361
  %v363 = vpop.f32.mrb[0].mxu0
  %364 = vmatprep.mubr.f32.mxu0 0.0
  %365 = vmatmul.mubr.f32.gmra.mrb[0].mxu0 %v149
  %v366 = vpop.f32.mrb[0].mxu0
  %v367 = vadd.f32 %v61, %v366
  %v368 = vpop.f32.mrb[0].mxu0
  %369 = vmatprep.mubr.f32.mxu0 0.0
  %370 = vmatmul.mubr.f32.gmra.mrb[0].mxu0 %v152
  %v371 = vpop.f32.mrb[0].mxu0
  %v372 = vadd.f32 %v61, %v371
  %v373 = vpop.f32.mrb[0].mxu0
  %374 = vmatprep.mubr.f32.mxu0 0.0
  %375 = vmatmul.mubr.f32.gmra.mrb[0].mxu0 %v155
  %v376 = vpop.f32.mrb[0].mxu0
  %v377 = vadd.f32 %v61, %v376
  %v378 = vpop.f32.mrb[0].mxu0
  %379 = vmatprep.mubr.f32.mxu0 0.0
  %380 = vmatmul.mubr.f32.gmra.mrb[0].mxu0 %v158
  %v381 = vpop.f32.mrb[0].mxu0
  %v382 = vadd.f32 %v61, %v381
  %v383 = vpop.f32.mrb[0].mxu0
  %384 = vdwg.mxu0
  %v385 = vmax.f32 %v227, 0.0
  %v386 = vmax.f32 %v232, 0.0
  %v387 = vmax.f32 %v237, 0.0
  %v388 = vmax.f32 %v242, 0.0
  %v389 = vmax.f32 %v247, 0.0
  %v390 = vmax.f32 %v252, 0.0
  %v391 = vmax.f32 %v257, 0.0
  %v392 = vmax.f32 %v262, 0.0
  %v393 = vmax.f32 %v267, 0.0
  %v394 = vmax.f32 %v272, 0.0
  %v395 = vmax.f32 %v277, 0.0
  %v396 = vmax.f32 %v282, 0.0
  %v397 = vmax.f32 %v287, 0.0
  %v398 = vmax.f32 %v292, 0.0
  %v399 = vmax.f32 %v297, 0.0
  %v400 = vmax.f32 %v302, 0.0
  %v401 = vmax.f32 %v307, 0.0
  %v402 = vmax.f32 %v312, 0.0
  %v403 = vmax.f32 %v317, 0.0
  %v404 = vmax.f32 %v322, 0.0
  %v405 = vmax.f32 %v327, 0.0
  %v406 = vmax.f32 %v332, 0.0
  %v407 = vmax.f32 %v337, 0.0
  %v408 = vmax.f32 %v342, 0.0
  %v409 = vmax.f32 %v347, 0.0
  %v410 = vmax.f32 %v352, 0.0
  %v411 = vmax.f32 %v357, 0.0
  %v412 = vmax.f32 %v362, 0.0
  %v413 = vmax.f32 %v367, 0.0
  %v414 = vmax.f32 %v372, 0.0
  %v415 = vmax.f32 %v377, 0.0
  %v416 = vmax.f32 %v382, 0.0
  %v417 = vld [vmem:[%s3] sm:$0xff]
  %v418 = vld [vmem:[%s3 + $0x8] sm:$0xff]
  %v419 = vld [vmem:[%s3 + $0x10] sm:$0xff]
  %v420 = vld [vmem:[%s3 + $0x18] sm:$0xff]
  %v421 = vld [vmem:[%s3 + $0x20] sm:$0xff]
  %v422 = vld [vmem:[%s3 + $0x28] sm:$0xff]
  %v423 = vld [vmem:[%s3 + $0x30] sm:$0xff]
  %v424 = vld [vmem:[%s3 + $0x38] sm:$0xff]
  %v425 = vld [vmem:[%s3 + $0x40] sm:$0xff]
  %v426 = vld [vmem:[%s3 + $0x48] sm:$0xff]
  %v427 = vld [vmem:[%s3 + $0x50] sm:$0xff]
  %v428 = vld [vmem:[%s3 + $0x58] sm:$0xff]
  %v429 = vld [vmem:[%s3 + $0x60] sm:$0xff]
  %v430 = vld [vmem:[%s3 + $0x68] sm:$0xff]
  %v431 = vld [vmem:[%s3 + $0x70] sm:$0xff]
  %v432 = vld [vmem:[%s3 + $0x78] sm:$0xff]
  %v433 = vld [vmem:[%s4] sm:$0x1]
  %v435 = vlaneseq
  %v436 = vshrl.u32 %v435, 7
  %v437 = vsub.s32 0, %v436
  %v438 = vrot.slane %v433, %v437
  %440 = vmatprep.subr.mxu0 0.0
  %441 = vmatpush1.msra.mxu0 %v417
  %442 = vmatprep.subr.mxu0 0.0
  %443 = vmatpush1.msra.mxu0 %v418
  %444 = vmatprep.subr.mxu0 0.0
  %445 = vmatpush1.msra.mxu0 %v419
  %446 = vmatprep.subr.mxu0 0.0
  %447 = vmatpush1.msra.mxu0 %v420
  %448 = vmatprep.subr.mxu0 0.0
  %449 = vmatpush1.msra.mxu0 %v421
  %450 = vmatprep.subr.mxu0 0.0
  %451 = vmatpush1.msra.mxu0 %v422
  %452 = vmatprep.subr.mxu0 0.0
  %453 = vmatpush1.msra.mxu0 %v423
  %454 = vmatprep.subr.mxu0 0.0
  %455 = vmatpush1.msra.mxu0 %v424
  %456 = vmatprep.subr.mxu0 0.0
  %457 = vmatpush1.msra.mxu0 %v425
  %458 = vmatprep.subr.mxu0 0.0
  %459 = vmatpush1.msra.mxu0 %v426
  %460 = vmatprep.subr.mxu0 0.0
  %461 = vmatpush1.msra.mxu0 %v427
  %462 = vmatprep.subr.mxu0 0.0
  %463 = vmatpush1.msra.mxu0 %v428
  %464 = vmatprep.subr.mxu0 0.0
  %465 = vmatpush1.msra.mxu0 %v429
  %466 = vmatprep.subr.mxu0 0.0
  %467 = vmatpush1.msra.mxu0 %v430
  %468 = vmatprep.subr.mxu0 0.0
  %469 = vmatpush1.msra.mxu0 %v431
  %470 = vmatprep.subr.mxu0 0.0
  %471 = vmatpush1.msra.mxu0 %v432
  %472 = vmatprep.subr.mxu0 0.0
  %473 = vmatpush1.msra.mxu0 0.0
  %474 = vmatprep.subr.mxu0 0.0
  %475 = vmatpush1.msra.mxu0 0.0
  %476 = vmatprep.subr.mxu0 0.0
  %477 = vmatpush1.msra.mxu0 0.0
  %478 = vmatprep.subr.mxu0 0.0
  %479 = vmatpush1.msra.mxu0 0.0
  %480 = vmatprep.subr.mxu0 0.0
  %481 = vmatpush1.msra.mxu0 0.0
  %482 = vmatprep.subr.mxu0 0.0
  %483 = vmatpush1.msra.mxu0 0.0
  %484 = vmatprep.subr.mxu0 0.0
  %485 = vmatpush1.msra.mxu0 0.0
  %486 = vmatprep.subr.mxu0 0.0
  %487 = vmatpush1.msra.mxu0 0.0
  %488 = vmatprep.subr.mxu0 0.0
  %489 = vmatpush1.msra.mxu0 0.0
  %490 = vmatprep.subr.mxu0 0.0
  %491 = vmatpush1.msra.mxu0 0.0
  %492 = vmatprep.subr.mxu0 0.0
  %493 = vmatpush1.msra.mxu0 0.0
  %494 = vmatprep.subr.mxu0 0.0
  %495 = vmatpush1.msra.mxu0 0.0
  %496 = vmatprep.subr.mxu0 0.0
  %497 = vmatpush1.msra.mxu0 0.0
  %498 = vmatprep.subr.mxu0 0.0
  %499 = vmatpush1.msra.mxu0 0.0
  %500 = vmatprep.subr.mxu0 0.0
  %501 = vmatpush1.msra.mxu0 0.0
  %502 = vmatprep.subr.mxu0 0.0
  %503 = vmatpush1.msra.mxu0 0.0
  %504 = vmatprep.mubr.f32.mxu0 0.0
  %505 = vmatmul.mubr.f32.gmra.mrb[0].mxu0 %v385
  %v506 = vpop.f32.mrb[0].mxu0
  %v507 = vadd.f32 %v438, %v506
  %v508 = vpop.f32.mrb[0].mxu0
  %509 = vmatprep.mubr.f32.mxu0 0.0
  %510 = vmatmul.mubr.f32.gmra.mrb[0].mxu0 %v386
  %v511 = vpop.f32.mrb[0].mxu0
  %v512 = vadd.f32 %v438, %v511
  %v513 = vpop.f32.mrb[0].mxu0
  %514 = vmatprep.mubr.f32.mxu0 0.0
  %515 = vmatmul.mubr.f32.gmra.mrb[0].mxu0 %v387
  %v516 = vpop.f32.mrb[0].mxu0
  %v517 = vadd.f32 %v438, %v516
  %v518 = vpop.f32.mrb[0].mxu0
  %519 = vmatprep.mubr.f32.mxu0 0.0
  %520 = vmatmul.mubr.f32.gmra.mrb[0].mxu0 %v388
  %v521 = vpop.f32.mrb[0].mxu0
  %v522 = vadd.f32 %v438, %v521
  %v523 = vpop.f32.mrb[0].mxu0
  %524 = vmatprep.mubr.f32.mxu0 0.0
  %525 = vmatmul.mubr.f32.gmra.mrb[0].mxu0 %v389
  %v526 = vpop.f32.mrb[0].mxu0
  %v527 = vadd.f32 %v438, %v526
  %v528 = vpop.f32.mrb[0].mxu0
  %529 = vmatprep.mubr.f32.mxu0 0.0
  %530 = vmatmul.mubr.f32.gmra.mrb[0].mxu0 %v390
  %v531 = vpop.f32.mrb[0].mxu0
  %v532 = vadd.f32 %v438, %v531
  %v533 = vpop.f32.mrb[0].mxu0
  %534 = vmatprep.mubr.f32.mxu0 0.0
  %535 = vmatmul.mubr.f32.gmra.mrb[0].mxu0 %v391
  %v536 = vpop.f32.mrb[0].mxu0
  %v537 = vadd.f32 %v438, %v536
  %v538 = vpop.f32.mrb[0].mxu0
  %539 = vmatprep.mubr.f32.mxu0 0.0
  %540 = vmatmul.mubr.f32.gmra.mrb[0].mxu0 %v392
  %v541 = vpop.f32.mrb[0].mxu0
  %v542 = vadd.f32 %v438, %v541
  %v543 = vpop.f32.mrb[0].mxu0
  %544 = vmatprep.mubr.f32.mxu0 0.0
  %545 = vmatmul.mubr.f32.gmra.mrb[0].mxu0 %v393
  %v546 = vpop.f32.mrb[0].mxu0
  %v547 = vadd.f32 %v438, %v546
  %v548 = vpop.f32.mrb[0].mxu0
  %549 = vmatprep.mubr.f32.mxu0 0.0
  %550 = vmatmul.mubr.f32.gmra.mrb[0].mxu0 %v394
  %v551 = vpop.f32.mrb[0].mxu0
  %v552 = vadd.f32 %v438, %v551
  %v553 = vpop.f32.mrb[0].mxu0
  %554 = vmatprep.mubr.f32.mxu0 0.0
  %555 = vmatmul.mubr.f32.gmra.mrb[0].mxu0 %v395
  %v556 = vpop.f32.mrb[0].mxu0
  %v557 = vadd.f32 %v438, %v556
  %v558 = vpop.f32.mrb[0].mxu0
  %559 = vmatprep.mubr.f32.mxu0 0.0
  %560 = vmatmul.mubr.f32.gmra.mrb[0].mxu0 %v396
  %v561 = vpop.f32.mrb[0].mxu0
  %v562 = vadd.f32 %v438, %v561
  %v563 = vpop.f32.mrb[0].mxu0
  %564 = vmatprep.mubr.f32.mxu0 0.0
  %565 = vmatmul.mubr.f32.gmra.mrb[0].mxu0 %v397
  %v566 = vpop.f32.mrb[0].mxu0
  %v567 = vadd.f32 %v438, %v566
  %v568 = vpop.f32.mrb[0].mxu0
  %569 = vmatprep.mubr.f32.mxu0 0.0
  %570 = vmatmul.mubr.f32.gmra.mrb[0].mxu0 %v398
  %v571 = vpop.f32.mrb[0].mxu0
  %v572 = vadd.f32 %v438, %v571
  %v573 = vpop.f32.mrb[0].mxu0
  %574 = vmatprep.mubr.f32.mxu0 0.0
  %575 = vmatmul.mubr.f32.gmra.mrb[0].mxu0 %v399
  %v576 = vpop.f32.mrb[0].mxu0
  %v577 = vadd.f32 %v438, %v576
  %v578 = vpop.f32.mrb[0].mxu0
  %579 = vmatprep.mubr.f32.mxu0 0.0
  %580 = vmatmul.mubr.f32.gmra.mrb[0].mxu0 %v400
  %v581 = vpop.f32.mrb[0].mxu0
  %v582 = vadd.f32 %v438, %v581
  %v583 = vpop.f32.mrb[0].mxu0
  %584 = vmatprep.mubr.f32.mxu0 0.0
  %585 = vmatmul.mubr.f32.gmra.mrb[0].mxu0 %v401
  %v586 = vpop.f32.mrb[0].mxu0
  %v587 = vadd.f32 %v438, %v586
  %v588 = vpop.f32.mrb[0].mxu0
  %589 = vmatprep.mubr.f32.mxu0 0.0
  %590 = vmatmul.mubr.f32.gmra.mrb[0].mxu0 %v402
  %v591 = vpop.f32.mrb[0].mxu0
  %v592 = vadd.f32 %v438, %v591
  %v593 = vpop.f32.mrb[0].mxu0
  %594 = vmatprep.mubr.f32.mxu0 0.0
  %595 = vmatmul.mubr.f32.gmra.mrb[0].mxu0 %v403
  %v596 = vpop.f32.mrb[0].mxu0
  %v597 = vadd.f32 %v438, %v596
  %v598 = vpop.f32.mrb[0].mxu0
  %599 = vmatprep.mubr.f32.mxu0 0.0
  %600 = vmatmul.mubr.f32.gmra.mrb[0].mxu0 %v404
  %v601 = vpop.f32.mrb[0].mxu0
  %v602 = vadd.f32 %v438, %v601
  %v603 = vpop.f32.mrb[0].mxu0
  %604 = vmatprep.mubr.f32.mxu0 0.0
  %605 = vmatmul.mubr.f32.gmra.mrb[0].mxu0 %v405
  %v606 = vpop.f32.mrb[0].mxu0
  %v607 = vadd.f32 %v438, %v606
  %v608 = vpop.f32.mrb[0].mxu0
  %609 = vmatprep.mubr.f32.mxu0 0.0
  %610 = vmatmul.mubr.f32.gmra.mrb[0].mxu0 %v406
  %v611 = vpop.f32.mrb[0].mxu0
  %v612 = vadd.f32 %v438, %v611
  %v613 = vpop.f32.mrb[0].mxu0
  %614 = vmatprep.mubr.f32.mxu0 0.0
  %615 = vmatmul.mubr.f32.gmra.mrb[0].mxu0 %v407
  %v616 = vpop.f32.mrb[0].mxu0
  %v617 = vadd.f32 %v438, %v616
  %v618 = vpop.f32.mrb[0].mxu0
  %619 = vmatprep.mubr.f32.mxu0 0.0
  %620 = vmatmul.mubr.f32.gmra.mrb[0].mxu0 %v408
  %v621 = vpop.f32.mrb[0].mxu0
  %v622 = vadd.f32 %v438, %v621
  %v623 = vpop.f32.mrb[0].mxu0
  %624 = vmatprep.mubr.f32.mxu0 0.0
  %625 = vmatmul.mubr.f32.gmra.mrb[0].mxu0 %v409
  %v626 = vpop.f32.mrb[0].mxu0
  %v627 = vadd.f32 %v438, %v626
  %v628 = vpop.f32.mrb[0].mxu0
  %629 = vmatprep.mubr.f32.mxu0 0.0
  %630 = vmatmul.mubr.f32.gmra.mrb[0].mxu0 %v410
  %v631 = vpop.f32.mrb[0].mxu0
  %v632 = vadd.f32 %v438, %v631
  %v633 = vpop.f32.mrb[0].mxu0
  %634 = vmatprep.mubr.f32.mxu0 0.0
  %635 = vmatmul.mubr.f32.gmra.mrb[0].mxu0 %v411
  %v636 = vpop.f32.mrb[0].mxu0
  %v637 = vadd.f32 %v438, %v636
  %v638 = vpop.f32.mrb[0].mxu0
  %639 = vmatprep.mubr.f32.mxu0 0.0
  %640 = vmatmul.mubr.f32.gmra.mrb[0].mxu0 %v412
  %v641 = vpop.f32.mrb[0].mxu0
  %v642 = vadd.f32 %v438, %v641
  %v643 = vpop.f32.mrb[0].mxu0
  %644 = vmatprep.mubr.f32.mxu0 0.0
  %645 = vmatmul.mubr.f32.gmra.mrb[0].mxu0 %v413
  %v646 = vpop.f32.mrb[0].mxu0
  %v647 = vadd.f32 %v438, %v646
  %v648 = vpop.f32.mrb[0].mxu0
  %649 = vmatprep.mubr.f32.mxu0 0.0
  %650 = vmatmul.mubr.f32.gmra.mrb[0].mxu0 %v414
  %v651 = vpop.f32.mrb[0].mxu0
  %v652 = vadd.f32 %v438, %v651
  %v653 = vpop.f32.mrb[0].mxu0
  %654 = vmatprep.mubr.f32.mxu0 0.0
  %655 = vmatmul.mubr.f32.gmra.mrb[0].mxu0 %v415
  %v656 = vpop.f32.mrb[0].mxu0
  %v657 = vadd.f32 %v438, %v656
  %v658 = vpop.f32.mrb[0].mxu0
  %659 = vmatprep.mubr.f32.mxu0 0.0
  %660 = vmatmul.mubr.f32.gmra.mrb[0].mxu0 %v416
  %v661 = vpop.f32.mrb[0].mxu0
  %v662 = vadd.f32 %v438, %v661
  %v663 = vpop.f32.mrb[0].mxu0
  %664 = vdwg.mxu0
  %v665 = vmul.f32 %v507, 0.5
  %v666 = vmul.f32 %v512, 0.5
  %v667 = vmul.f32 %v517, 0.5
  %v668 = vmul.f32 %v522, 0.5
  %v669 = vmul.f32 %v527, 0.5
  %v670 = vmul.f32 %v532, 0.5
  %v671 = vmul.f32 %v537, 0.5
  %v672 = vmul.f32 %v542, 0.5
  %v673 = vmul.f32 %v547, 0.5
  %v674 = vmul.f32 %v552, 0.5
  %v675 = vmul.f32 %v557, 0.5
  %v676 = vmul.f32 %v562, 0.5
  %v677 = vmul.f32 %v567, 0.5
  %v678 = vmul.f32 %v572, 0.5
  %v679 = vmul.f32 %v577, 0.5
  %v680 = vmul.f32 %v582, 0.5
  %v681 = vmul.f32 %v587, 0.5
  %v682 = vmul.f32 %v592, 0.5
  %v683 = vmul.f32 %v597, 0.5
  %v684 = vmul.f32 %v602, 0.5
  %v685 = vmul.f32 %v607, 0.5
  %v686 = vmul.f32 %v612, 0.5
  %v687 = vmul.f32 %v617, 0.5
  %v688 = vmul.f32 %v622, 0.5
  %v689 = vmul.f32 %v627, 0.5
  %v690 = vmul.f32 %v632, 0.5
  %v691 = vmul.f32 %v637, 0.5
  %v692 = vmul.f32 %v642, 0.5
  %v693 = vmul.f32 %v647, 0.5
  %v694 = vmul.f32 %v652, 0.5
  %v695 = vmul.f32 %v657, 0.5
  %v696 = vmul.f32 %v662, 0.5
  %v697 = vtanh.pop %v665
  %v698 = vtanh.pop %v666
  %v699 = vtanh.pop %v667
  %v700 = vtanh.pop %v668
  %v701 = vtanh.pop %v669
  %v702 = vtanh.pop %v670
  %v703 = vtanh.pop %v671
  %v704 = vtanh.pop %v672
  %v705 = vtanh.pop %v673
  %v706 = vtanh.pop %v674
  %v707 = vtanh.pop %v675
  %v708 = vtanh.pop %v676
  %v709 = vtanh.pop %v677
  %v710 = vtanh.pop %v678
  %v711 = vtanh.pop %v679
  %v712 = vtanh.pop %v680
  %v713 = vtanh.pop %v681
  %v714 = vtanh.pop %v682
  %v715 = vtanh.pop %v683
  %v716 = vtanh.pop %v684
  %v717 = vtanh.pop %v685
  %v718 = vtanh.pop %v686
  %v719 = vtanh.pop %v687
  %v720 = vtanh.pop %v688
  %v721 = vtanh.pop %v689
  %v722 = vtanh.pop %v690
  %v723 = vtanh.pop %v691
  %v724 = vtanh.pop %v692
  %v725 = vtanh.pop %v693
  %v726 = vtanh.pop %v694
  %v727 = vtanh.pop %v695
  %v728 = vtanh.pop %v696
  %v729 = vmul.f32 %v697, 0.5
  %v730 = vmul.f32 %v698, 0.5
  %v731 = vmul.f32 %v699, 0.5
  %v732 = vmul.f32 %v700, 0.5
  %v733 = vmul.f32 %v701, 0.5
  %v734 = vmul.f32 %v702, 0.5
  %v735 = vmul.f32 %v703, 0.5
  %v736 = vmul.f32 %v704, 0.5
  %v737 = vmul.f32 %v705, 0.5
  %v738 = vmul.f32 %v706, 0.5
  %v739 = vmul.f32 %v707, 0.5
  %v740 = vmul.f32 %v708, 0.5
  %v741 = vmul.f32 %v709, 0.5
  %v742 = vmul.f32 %v710, 0.5
  %v743 = vmul.f32 %v711, 0.5
  %v744 = vmul.f32 %v712, 0.5
  %v745 = vmul.f32 %v713, 0.5
  %v746 = vmul.f32 %v714, 0.5
  %v747 = vmul.f32 %v715, 0.5
  %v748 = vmul.f32 %v716, 0.5
  %v749 = vmul.f32 %v717, 0.5
  %v750 = vmul.f32 %v718, 0.5
  %v751 = vmul.f32 %v719, 0.5
  %v752 = vmul.f32 %v720, 0.5
  %v753 = vmul.f32 %v721, 0.5
  %v754 = vmul.f32 %v722, 0.5
  %v755 = vmul.f32 %v723, 0.5
  %v756 = vmul.f32 %v724, 0.5
  %v757 = vmul.f32 %v725, 0.5
  %v758 = vmul.f32 %v726, 0.5
  %v759 = vmul.f32 %v727, 0.5
  %v760 = vmul.f32 %v728, 0.5
  %v761 = vadd.f32 %v729, 0.5
  %v762 = vadd.f32 %v730, 0.5
  %v763 = vadd.f32 %v731, 0.5
  %v764 = vadd.f32 %v732, 0.5
  %v765 = vadd.f32 %v733, 0.5
  %v766 = vadd.f32 %v734, 0.5
  %v767 = vadd.f32 %v735, 0.5
  %v768 = vadd.f32 %v736, 0.5
  %v769 = vadd.f32 %v737, 0.5
  %v770 = vadd.f32 %v738, 0.5
  %v771 = vadd.f32 %v739, 0.5
  %v772 = vadd.f32 %v740, 0.5
  %v773 = vadd.f32 %v741, 0.5
  %v774 = vadd.f32 %v742, 0.5
  %v775 = vadd.f32 %v743, 0.5
  %v776 = vadd.f32 %v744, 0.5
  %v777 = vadd.f32 %v745, 0.5
  %v778 = vadd.f32 %v746, 0.5
  %v779 = vadd.f32 %v747, 0.5
  %v780 = vadd.f32 %v748, 0.5
  %v781 = vadd.f32 %v749, 0.5
  %v782 = vadd.f32 %v750, 0.5
  %v783 = vadd.f32 %v751, 0.5
  %v784 = vadd.f32 %v752, 0.5
  %v785 = vadd.f32 %v753, 0.5
  %v786 = vadd.f32 %v754, 0.5
  %v787 = vadd.f32 %v755, 0.5
  %v788 = vadd.f32 %v756, 0.5
  %v789 = vadd.f32 %v757, 0.5
  %v790 = vadd.f32 %v758, 0.5
  %v791 = vadd.f32 %v759, 0.5
  %v792 = vadd.f32 %v760, 0.5
  %793 = vst [vmem:[%s5] sm:$0xff] %v761
  %794 = vst [vmem:[%s5 + $0x8] sm:$0xff] %v762
  %795 = vst [vmem:[%s5 + $0x10] sm:$0xff] %v763
  %796 = vst [vmem:[%s5 + $0x18] sm:$0xff] %v764
  %797 = vst [vmem:[%s5 + $0x20] sm:$0xff] %v765
  %798 = vst [vmem:[%s5 + $0x28] sm:$0xff] %v766
  %799 = vst [vmem:[%s5 + $0x30] sm:$0xff] %v767
  %800 = vst [vmem:[%s5 + $0x38] sm:$0xff] %v768
  %801 = vst [vmem:[%s5 + $0x40] sm:$0xff] %v769
  %802 = vst [vmem:[%s5 + $0x48] sm:$0xff] %v770
  %803 = vst [vmem:[%s5 + $0x50] sm:$0xff] %v771
  %804 = vst [vmem:[%s5 + $0x58] sm:$0xff] %v772
  %805 = vst [vmem:[%s5 + $0x60] sm:$0xff] %v773
  %806 = vst [vmem:[%s5 + $0x68] sm:$0xff] %v774
  %807 = vst [vmem:[%s5 + $0x70] sm:$0xff] %v775
  %808 = vst [vmem:[%s5 + $0x78] sm:$0xff] %v776
  %809 = vst [vmem:[%s5 + $0x80] sm:$0xff] %v777
  %810 = vst [vmem:[%s5 + $0x88] sm:$0xff] %v778
  %811 = vst [vmem:[%s5 + $0x90] sm:$0xff] %v779
  %812 = vst [vmem:[%s5 + $0x98] sm:$0xff] %v780
  %813 = vst [vmem:[%s5 + $0xa0] sm:$0xff] %v781
  %814 = vst [vmem:[%s5 + $0xa8] sm:$0xff] %v782
  %815 = vst [vmem:[%s5 + $0xb0] sm:$0xff] %v783
  %816 = vst [vmem:[%s5 + $0xb8] sm:$0xff] %v784
  %817 = vst [vmem:[%s5 + $0xc0] sm:$0xff] %v785
  %818 = vst [vmem:[%s5 + $0xc8] sm:$0xff] %v786
  %819 = vst [vmem:[%s5 + $0xd0] sm:$0xff] %v787
  %820 = vst [vmem:[%s5 + $0xd8] sm:$0xff] %v788
  %821 = vst [vmem:[%s5 + $0xe0] sm:$0xff] %v789
  %822 = vst [vmem:[%s5 + $0xe8] sm:$0xff] %v790
  %823 = vst [vmem:[%s5 + $0xf0] sm:$0xff] %v791
  %824 = vst [vmem:[%s5 + $0xf8] sm:$0xff] %v792
  // Predicated region
  $region22: #{mlp_forward_padded.1} parent=0 // pred_check
    _
  $region23: #{mlp_forward_padded.1} parent=0 // pred_check_branch
    %826 = sbr.rel (0) target = $region25
  $region24: #{mlp_forward_padded.1} parent=0 // pred_region
    _
  $region25: #{mlp_forward_padded.1} parent=0 // pred_fallthru
    _
  // Predicated region
  $region26: #{mlp_forward_padded.1} parent=0 // pred_check
    _
  $region27: #{mlp_forward_padded.1} parent=0 // pred_check_branch
    %828 = sbr.rel (0) target = $region29
  $region28: #{mlp_forward_padded.1} parent=0 // pred_region
    _
  $region29: #{mlp_forward_padded.1} parent=0 // pred_fallthru
    _

</llo_original>
